<compile_context>
chip_gen: v7x
topology: tpu7x:2x2x1
jax: 0.10.0
libtpu: 0.0.40
codegen_flags: <defaults>
</compile_context>

<pallas_src>
import math

import jax
import jax.numpy as jnp
from jax.experimental import pallas as pl
from jax.experimental.pallas import tpu as pltpu

EPS = 1e-12


# --------------------------------------------------------------------------
# Kernel
# --------------------------------------------------------------------------
def _masking_kernel(s_ref, x_ref, o_ref):
    # s_ref: (K, N) f32 block-diagonal selection*window matrix (constant block)
    # x_ref: (TM, K) lane-folded input row-group tile
    # o_ref: (TM, N) lane-folded output row-group tile
    # One MXU matmul does the window slice + gaussian multiply; each output
    # column of S has a single nonzero, so this equals the elementwise x*mask.
    x = x_ref[...].astype(jnp.float32)
    o_ref[...] = jnp.dot(x, s_ref[...],
                         preferred_element_type=jnp.float32).astype(o_ref.dtype)


# --------------------------------------------------------------------------
# Host-side sizing helpers
# --------------------------------------------------------------------------
def _vmem_budget():
    """(per-step tile budget, vmem_limit_bytes) sized per TPU generation."""
    cap = None
    try:
        cap = getattr(pltpu.get_tpu_info(), "vmem_capacity_bytes", None)
    except Exception:  # pragma: no cover - conservative fallback
        cap = None
    if cap is not None and cap >= 100 * 1024 * 1024:      # v5e / v6e: 128 MiB VMEM
        return 32 * 1024 * 1024, 64 * 1024 * 1024
    return 8 * 1024 * 1024, 32 * 1024 * 1024              # v7x: 64 MiB per TC


def _choose_group(rows, d, r_mask):
    """Rows folded into the lane axis: aim for ~128-lane-wide output blocks
    while keeping the contraction dim G*D modest; G must divide rows."""
    target = min(max(1, -(-128 // r_mask)), max(1, 256 // d))
    target = min(target, rows)
    for g in range(target, 0, -1):
        if rows % g == 0:
            return g
    return 1


def _choose_tile_rows(row_groups, k, n, itemsize, budget_bytes):
    """Largest row-group tile whose double-buffered in+out blocks fit budget."""
    itemsize = int(itemsize)
    sub = max(8, 32 // max(itemsize, 1))        # f32:8, bf16:16, int8/fp8:32
    per_group = 2 * (k + n) * itemsize          # 2 pipeline buffers each
    tm = max(sub, int(budget_bytes) // max(per_group, 1))
    tm = min(tm, row_groups)
    if tm < row_groups:
        tm = max(sub, (tm // sub) * sub)
    # If everything fits one step but the problem is big enough to amortize the
    # ~0.35 us per-step overhead, use >=2 steps so the "parallel" grid axis can
    # shard across both TensorCores on v7x (harmless on single-TC v5e/v6e).
    total_bytes = row_groups * (k + n) * itemsize
    if tm >= row_groups and total_bytes >= (4 << 20) and row_groups >= 2 * sub:
        half = (row_groups + 1) // 2
        tm = min(row_groups, ((half + sub - 1) // sub) * sub)
    return int(max(1, min(tm, row_groups)))


# --------------------------------------------------------------------------
# Forward wrapper (mask='gaussian')
# --------------------------------------------------------------------------
def masking_forward(x, r_masking, w_space, *, input_dim, factor, hard):
    """Equivalent of Masking.forward for mask='gaussian'."""
    # Host-side (trace-time) glue: the window length fixes the OUTPUT SHAPE,
    # exactly like the Python int() in the PyTorch module.
    # TODO(synk): under jax.jit this forces r_masking to be concrete at trace
    # time — same output-shape data-dependence as the original int().
    r_val = float(jnp.asarray(r_masking).reshape(-1)[0])
    r_mask = int(math.sqrt(-math.log(EPS) / 0.5) * r_val * factor * 2)
    if not 0 < r_mask <= input_dim:
        raise ValueError(f"window length {r_mask} outside (0, {input_dim}]")
    lo = (input_dim - r_mask) // 2

    B, C, D = x.shape
    assert D == input_dim, (D, input_dim)
    rows = B * C

    # Gaussian window (f32), identical math to the reference.
    r_arr = jnp.asarray(r_masking, jnp.float32).reshape(-1)[0]
    w_win = w_space.astype(jnp.float32)[lo:lo + r_mask]
    mask = jnp.exp(-0.5 * (w_win / (factor * r_arr)) ** 2)
    if hard:
        # (mask+eps)/(mask+eps) == 1 and 0/(mask+eps) == 0 since mask+eps > 0.
        mask = jnp.where(mask > EPS, 1.0, 0.0)

    # Lane-fold: pack G consecutive rows into the lane axis (free reshapes).
    G = _choose_group(rows, D, r_mask)
    row_groups = rows // G
    K, N = G * D, G * r_mask
    x_packed = x.reshape(row_groups, K)

    # Block-diagonal selection * window matrix:
    #   out_packed[:, g*r_mask + j] = x_packed[:, g*D + lo + j] * mask[j]
    diag = jnp.diag(mask)
    sel = jnp.zeros((K, N), jnp.float32)
    for g in range(G):
        sel = sel.at[g * D + lo: g * D + lo + r_mask,
                     g * r_mask:(g + 1) * r_mask].set(diag)

    budget, vmem_limit = _vmem_budget()
    tm = _choose_tile_rows(row_groups, K, N, x.dtype.itemsize, budget)
    grid = (pl.cdiv(row_groups, tm),)

    out = pl.pallas_call(
        _masking_kernel,
        out_shape=jax.ShapeDtypeStruct((row_groups, N), x.dtype),
        grid=grid,
        in_specs=[
            pl.BlockSpec((K, N), lambda i: (0, 0)),     # selection*mask, fetched once
            pl.BlockSpec((tm, K), lambda i: (i, 0)),    # folded input row-groups
        ],
        out_specs=pl.BlockSpec((tm, N), lambda i: (i, 0)),
        compiler_params=pltpu.CompilerParams(
            dimension_semantics=("parallel",),
            vmem_limit_bytes=vmem_limit,
        ),
    )(sel, x_packed)

    return out.reshape(B, C, r_mask)


# --------------------------------------------------------------------------
# Pure-JAX reference (faithful port of the PyTorch forward, gaussian branch)
# --------------------------------------------------------------------------
def _reference(x, r_masking, w_space, *, input_dim, factor, hard):
    r_val = float(r_masking[0])
    mask = jnp.exp(-0.5 * (w_space / (factor * r_masking[0])) ** 2)
    r_mask = int(math.sqrt(-math.log(EPS) / 0.5) * r_val * factor * 2)
    lo = (input_dim - r_mask) // 2
    hi = (input_dim + r_mask) // 2
    mask = mask[lo:hi]
    if hard:
        mask = jnp.where(mask > EPS, (mask + EPS) / (mask + EPS),
                         0.0 / (mask + EPS))
    return x[:, :, lo:hi] * mask


if __name__ == "__main__":
    # Module config (mask='gaussian', hard=False), deterministic params.
    input_dim = 16
    hard = False
    factor = float(input_dim // 4 / math.sqrt(-math.log(EPS) / 0.5))

    # nn.Parameter init exactly as in __init__ (note: -dim // 2 + 1, torch-style).
    w_space = jnp.linspace(-input_dim // 2 + 1, input_dim // 2 + 1,
                           input_dim, dtype=jnp.float32)
    r_masking = jnp.array([1.0], dtype=jnp.float32)

    # Deterministic small input: B=2, C=4, D=16.
    key = jax.random.PRNGKey(0)
    x = jax.random.normal(key, (2, 4, input_dim), dtype=jnp.float32)

    out = masking_forward(x, r_masking, w_space,
                          input_dim=input_dim, factor=factor, hard=hard)
    out = jax.block_until_ready(out)

    ref = _reference(x, r_masking, w_space,
                     input_dim=input_dim, factor=factor, hard=hard)
    assert out.shape == ref.shape, (out.shape, ref.shape)
    assert jnp.allclose(out, ref, atol=1e-5, rtol=1e-5), \
        float(jnp.max(jnp.abs(out - ref)))

    print("KERNEL_OK")
</pallas_src>

<mosaic_0001>
module attributes {stable_mosaic.version = 11 : i64} {
  func.func @_masking_kernel(%arg0: i32, %arg1: memref<128x64xf32, #tpu.memory_space<vmem>>, %arg2: memref<1x128xf32, #tpu.memory_space<vmem>>, %arg3: memref<1x64xf32, #tpu.memory_space<vmem>>) attributes {dimension_semantics = [#tpu.dimension_semantics<parallel>], iteration_bounds = array<i64: 1>, scalar_prefetch = 0 : i64, scratch_operands = 0 : i64, tpu.core_type = #tpu.core_type<tc>, window_params = [{pipeline_mode = #tpu.pipeline_mode<synchronous>, transform_indices = @transform_0, window_bounds = array<i64: 128, 64>}, {transform_indices = @transform_1, window_bounds = array<i64: 1, 128>}, {transform_indices = @transform_2, window_bounds = array<i64: 1, 64>}]} {
    %c0 = arith.constant 0 : index
    %c0_0 = arith.constant 0 : index
    %0 = vector.load %arg2[%c0, %c0_0] : memref<1x128xf32, #tpu.memory_space<vmem>>, vector<1x128xf32>
    %c0_1 = arith.constant 0 : index
    %c0_2 = arith.constant 0 : index
    %1 = vector.load %arg1[%c0_1, %c0_2] : memref<128x64xf32, #tpu.memory_space<vmem>>, vector<128x64xf32>
    %cst = arith.constant dense<0.000000e+00> : vector<1x64xf32>
    %2 = tpu.matmul %0, %1, %cst {dimension_numbers = #tpu.dot_dimension_numbers<[1], [0], [0], [1], [0, 0, 1, 1], [], []>} : vector<1x128xf32>, vector<128x64xf32>, vector<1x64xf32> -> vector<1x64xf32>
    %c0_3 = arith.constant 0 : index
    %c0_4 = arith.constant 0 : index
    %3 = vector.load %arg3[%c0_3, %c0_4] : memref<1x64xf32, #tpu.memory_space<vmem>>, vector<1x64xf32>
    tpu.vector_store %arg3[%c0_3, %c0_4], %2 {strides = array<i32>} : memref<1x64xf32, #tpu.memory_space<vmem>>, vector<1x64xf32>,
    return
  }
  func.func @transform_0(%arg0: i32) -> (i32, i32) {
    %c0_i32 = arith.constant 0 : i32
    %c0_i32_0 = arith.constant 0 : i32
    %c0_i32_1 = arith.constant 0 : i32
    return %c0_i32, %c0_i32_0 : i32, i32
  }
  func.func @transform_1(%arg0: i32) -> (i32, i32) {
    %c0_i32 = arith.constant 0 : i32
    %c0_i32_0 = arith.constant 0 : i32
    return %arg0, %c0_i32 : i32, i32
  }
  func.func @transform_2(%arg0: i32) -> (i32, i32) {
    %c0_i32 = arith.constant 0 : i32
    %c0_i32_0 = arith.constant 0 : i32
    return %arg0, %c0_i32 : i32, i32
  }
}

</mosaic_0001>

<llo_original>
// kernel: tpu_custom_call.1
$region0: #{tpu_custom_call.1}
  #allocation0 [shape = 'u32[]', space=smem, size = 0x4, offset = 0x4, fixed_abs, tag = 'smem constant byte address 0x4 - core index']
  #allocation1 [shape = 'u32[144,128]{1,0:T(1,128)}', space=vmem, size = 0x12000, scoped, tag = 'internal scratch']
  %s0 = inlined_call_operand.vmem [shape: f32[128,64], index: 0, kind: input, shape index: {}]
  %s1 = inlined_call_operand.vmem [shape: f32[1,128], index: 1, kind: input, shape index: {}]
  %s2 = inlined_call_operand.hbm [shape: f32[1,64], index: 2, kind: output, shape index: {}]
  %s3 = sld [smem:[#allocation0]]
  $region18: #{tpu_custom_call.1} parent=0
    _
  %s5 = ssub.s32 1, %s3
  %s6 = scalar_select 0, %s5, %s3
  $region1: #{tpu_custom_call.1} parent=0
    #allocation2 [shape = 'u8[512]{0}', space=vmem, size = 0x400, scoped, tag = 'output window, operand 0, single buffered']
    #allocation3 [shape = 's32[1]{0}', space=sflag, size = 0x4, scoped, tag = 'scoped memory for tpu_custom_call.1']
    %7 = vsyncpa [#allocation3], 0
    // Predicated region
    $region2: #{tpu_custom_call.1} parent=1 // pred_check
      _
    $region3: #{tpu_custom_call.1} parent=1 // pred_check_branch
      %9 = sbr.rel (0) target = $region5
    $region4: #{tpu_custom_call.1} parent=1 // pred_region
      _
    $region5: #{tpu_custom_call.1} parent=1 // pred_fallthru
      _
    // Predicated region
    $region6: #{tpu_custom_call.1} parent=1 // pred_check
      _
    $region7: #{tpu_custom_call.1} parent=1 // pred_check_branch
      %11 = sbr.rel (0) target = $region9
    $region8: #{tpu_custom_call.1} parent=1 // pred_region
      _
    $region9: #{tpu_custom_call.1} parent=1 // pred_fallthru
      _
    %v12 = vld [vmem:[%s1] sm:$0x1]
    %v13 = vld [vmem:[%s0] sm:$0xff]
    %v14 = vld [vmem:[%s0 + $0x8] sm:$0xff]
    %v15 = vld [vmem:[%s0 + $0x10] sm:$0xff]
    %v16 = vld [vmem:[%s0 + $0x18] sm:$0xff]
    %v17 = vld [vmem:[%s0 + $0x20] sm:$0xff]
    %v18 = vld [vmem:[%s0 + $0x28] sm:$0xff]
    %v19 = vld [vmem:[%s0 + $0x30] sm:$0xff]
    %v20 = vld [vmem:[%s0 + $0x38] sm:$0xff]
    %v21 = vld [vmem:[%s0 + $0x40] sm:$0xff]
    %v22 = vld [vmem:[%s0 + $0x48] sm:$0xff]
    %v23 = vld [vmem:[%s0 + $0x50] sm:$0xff]
    %v24 = vld [vmem:[%s0 + $0x58] sm:$0xff]
    %v25 = vld [vmem:[%s0 + $0x60] sm:$0xff]
    %v26 = vld [vmem:[%s0 + $0x68] sm:$0xff]
    %v27 = vld [vmem:[%s0 + $0x70] sm:$0xff]
    %v28 = vld [vmem:[%s0 + $0x78] sm:$0xff]
    %29 = vmatprep.subr.mxu0 0.0
    %30 = vmatpush1.msra.mxu0 %v13
    %31 = vmatprep.subr.mxu0 0.0
    %32 = vmatpush1.msra.mxu0 %v14
    %33 = vmatprep.subr.mxu0 0.0
    %34 = vmatpush1.msra.mxu0 %v15
    %35 = vmatprep.subr.mxu0 0.0
    %36 = vmatpush1.msra.mxu0 %v16
    %37 = vmatprep.subr.mxu0 0.0
    %38 = vmatpush1.msra.mxu0 %v17
    %39 = vmatprep.subr.mxu0 0.0
    %40 = vmatpush1.msra.mxu0 %v18
    %41 = vmatprep.subr.mxu0 0.0
    %42 = vmatpush1.msra.mxu0 %v19
    %43 = vmatprep.subr.mxu0 0.0
    %44 = vmatpush1.msra.mxu0 %v20
    %45 = vmatprep.subr.mxu0 0.0
    %46 = vmatpush1.msra.mxu0 %v21
    %47 = vmatprep.subr.mxu0 0.0
    %48 = vmatpush1.msra.mxu0 %v22
    %49 = vmatprep.subr.mxu0 0.0
    %50 = vmatpush1.msra.mxu0 %v23
    %51 = vmatprep.subr.mxu0 0.0
    %52 = vmatpush1.msra.mxu0 %v24
    %53 = vmatprep.subr.mxu0 0.0
    %54 = vmatpush1.msra.mxu0 %v25
    %55 = vmatprep.subr.mxu0 0.0
    %56 = vmatpush1.msra.mxu0 %v26
    %57 = vmatprep.subr.mxu0 0.0
    %58 = vmatpush1.msra.mxu0 %v27
    %59 = vmatprep.subr.mxu0 0.0
    %60 = vmatpush1.msra.mxu0 %v28
    %61 = vmatprep.subr.mxu0 0.0
    %62 = vmatpush1.msra.mxu0 0.0
    %63 = vmatprep.subr.mxu0 0.0
    %64 = vmatpush1.msra.mxu0 0.0
    %65 = vmatprep.subr.mxu0 0.0
    %66 = vmatpush1.msra.mxu0 0.0
    %67 = vmatprep.subr.mxu0 0.0
    %68 = vmatpush1.msra.mxu0 0.0
    %69 = vmatprep.subr.mxu0 0.0
    %70 = vmatpush1.msra.mxu0 0.0
    %71 = vmatprep.subr.mxu0 0.0
    %72 = vmatpush1.msra.mxu0 0.0
    %73 = vmatprep.subr.mxu0 0.0
    %74 = vmatpush1.msra.mxu0 0.0
    %75 = vmatprep.subr.mxu0 0.0
    %76 = vmatpush1.msra.mxu0 0.0
    %77 = vmatprep.subr.mxu0 0.0
    %78 = vmatpush1.msra.mxu0 0.0
    %79 = vmatprep.subr.mxu0 0.0
    %80 = vmatpush1.msra.mxu0 0.0
    %81 = vmatprep.subr.mxu0 0.0
    %82 = vmatpush1.msra.mxu0 0.0
    %83 = vmatprep.subr.mxu0 0.0
    %84 = vmatpush1.msra.mxu0 0.0
    %85 = vmatprep.subr.mxu0 0.0
    %86 = vmatpush1.msra.mxu0 0.0
    %87 = vmatprep.subr.mxu0 0.0
    %88 = vmatpush1.msra.mxu0 0.0
    %89 = vmatprep.subr.mxu0 0.0
    %90 = vmatpush1.msra.mxu0 0.0
    %91 = vmatprep.subr.mxu0 0.0
    %92 = vmatpush1.msra.mxu0 0.0
    %93 = vmatprep.mubr.f32.mxu0 0.0
    %94 = vmatmul.mubr.f32.gmra.mrb[0].mxu0 %v12
    %v95 = vpop.f32.mrb[0].mxu0
    %v96 = vadd.f32 0.0, %v95
    %v97 = vpop.f32.mrb[0].mxu0
    %98 = vdwg.mxu0
    %vm99 = vcmask 516096
    %100 = vst.msk [vmem:[#allocation2] sm:$0x1] %vm99, %v96
    // Predicated region
    $region10: #{tpu_custom_call.1} parent=1 // pred_check
      _
    $region11: #{tpu_custom_call.1} parent=1 // pred_check_branch
      %102 = sbr.rel (0) target = $region13
    $region12: #{tpu_custom_call.1} parent=1 // pred_region
      %s104 = ssub.s32 16, 16
      %105 = vsyncadd [#allocation3], %s104
      %s107 = sshll.u32 [#allocation2], 4
      %s108 = int_to_ptr.vmem [resolvable:$true] %s107
      %110 = dma.vmem_to_hbm [thread:$0]  %s108, 16, %s2, [#allocation3]
    $region13: #{tpu_custom_call.1} parent=1 // pred_fallthru
      _
    // Predicated region
    $region14: #{tpu_custom_call.1} parent=1 // pred_check
      _
    $region15: #{tpu_custom_call.1} parent=1 // pred_check_branch
      %112 = sbr.rel (0) target = $region17
    $region16: #{tpu_custom_call.1} parent=1 // pred_region
      %113 = dma.done [#allocation3], 16
    $region17: #{tpu_custom_call.1} parent=1 // pred_fallthru
      _
    %114 = vsyncpa [#allocation3], 1

</llo_original>
